<compile_context>
chip_gen: v7x
topology: tpu7x:2x2x1
jax: 0.10.0
libtpu: 0.0.40
codegen_flags: <defaults>
</compile_context>

<pallas_src>
import math

import jax
import jax.numpy as jnp
import numpy as np
from jax.experimental import pallas as pl
from jax.experimental.pallas import tpu as pltpu


def _group_lstm_kernel(x_ref, h_ref, c_ref, wi_ref, wh_ref,
                       h_out_ref, c_out_ref):
    """One grid step processes `block_n` LSTM blocks.

    x_ref:     (B, Nb, D)
    h_ref:     (B, Nb, H)
    c_ref:     (B, Nb, H)
    wi_ref:    (Nb, D, 4H)
    wh_ref:    (Nb, H, 4H)
    h_out_ref: (B, Nb*H)   lane-dense output slab
    c_out_ref: (B, Nb*H)
    """
    Nb = wi_ref.shape[0]
    H = h_ref.shape[-1]

    # Load the (tiny) activation tiles once; weights are loaded per block
    # inside the loop so only one block's weight tile is live at a time.
    x_all = x_ref[...]
    h_all = h_ref[...]
    c_all = c_ref[...]

    # Static (trace-time) unroll over the blocks in this grid step.  Streaming
    # per block keeps the live set to one (B, 4H) preact tile + one weight
    # tile; results are stored immediately into the lane-dense output slab.
    for n in range(Nb):
        pre = jnp.dot(x_all[:, n, :], wi_ref[n],
                      preferred_element_type=jnp.float32)
        pre = pre + jnp.dot(h_all[:, n, :], wh_ref[n],
                            preferred_element_type=jnp.float32)

        # Gate order matches the PyTorch module: sigmoid on the first 3H
        # columns (i, f, o), tanh on the last H (g).
        i_t = jax.nn.sigmoid(pre[:, :H])
        f_t = jax.nn.sigmoid(pre[:, H:2 * H])
        o_t = jax.nn.sigmoid(pre[:, 2 * H:3 * H])
        g_t = jnp.tanh(pre[:, 3 * H:])

        c_t = c_all[:, n, :].astype(jnp.float32) * f_t + i_t * g_t
        h_t = o_t * jnp.tanh(c_t)

        h_out_ref[:, n * H:(n + 1) * H] = h_t.astype(h_out_ref.dtype)
        c_out_ref[:, n * H:(n + 1) * H] = c_t.astype(c_out_ref.dtype)


def _pick_block_n(N, D, H, itemsize, budget_bytes=24 * 1024 * 1024):
    """Largest per-step block of LSTM units whose double-buffered weights fit VMEM.

    Returns N (grid=(1,)) whenever everything fits — the common RIM case —
    so there is a single grid step and zero per-step overhead.  For very
    large hidden sizes it tiles N; the tile is a multiple of 8 with an
    H-span that is a multiple of 128, so every BlockSpec keeps the (8, 128)
    sublane/lane tiling rules.
    """
    per_block = 2 * (D + H) * 4 * H * itemsize  # [Wi; Wh], double-buffered
    cap = int(budget_bytes // max(per_block, 1))
    if cap >= N:
        return N
    step = 8
    while (step * H) % 128 and step < 128:
        step += 8
    blk = (max(cap, step) // step) * step
    return max(step, min(blk, N))


def group_lstm_cell(x, h, c, w_i2h, w_h2h, *, block_n=None):
    """Pallas implementation of GroupLSTMCell.forward.

    x:     (B, N, inp_size)
    h, c:  (B, N, hidden)
    w_i2h: (N, inp_size, 4*hidden)
    w_h2h: (N, hidden, 4*hidden)
    returns (h_t, c_t), each (B, N, hidden)
    """
    B, N, D = x.shape
    H = h.shape[-1]
    assert w_i2h.shape == (N, D, 4 * H)
    assert w_h2h.shape == (N, H, 4 * H)

    itemsize = np.dtype(x.dtype).itemsize
    if block_n is None:
        # NOTE: on v7x (2 TensorCores) a caller can pass block_n <= ceil(N/2)
        # (multiple of 8 at large N) to shard the "parallel" N axis across
        # both cores; on single-TC v5e/v6e the shortest grid wins.
        block_n = _pick_block_n(N, D, H, itemsize)
    grid = (pl.cdiv(N, block_n),)

    cost = pl.CostEstimate(
        flops=2 * B * N * (D + H) * 4 * H,
        transcendentals=5 * B * N * H,  # sigmoid(3H) + tanh(H) + tanh(c_t)
        bytes_accessed=(x.size + h.size + c.size + w_i2h.size + w_h2h.size
                        + 2 * B * N * H) * itemsize,
    )

    # TODO(synk): when this cell runs inside RIM's recurrent time loop, add a
    # T grid axis ("arbitrary") with a constant weight index_map so the
    # stacked weights stay VMEM-resident across timesteps, and alias h/c via
    # input_output_aliases for the in-place state update.
    h_flat, c_flat = pl.pallas_call(
        _group_lstm_kernel,
        grid=grid,
        in_specs=[
            pl.BlockSpec((B, block_n, D), lambda n: (0, n, 0)),         # x
            pl.BlockSpec((B, block_n, H), lambda n: (0, n, 0)),         # h
            pl.BlockSpec((B, block_n, H), lambda n: (0, n, 0)),         # c
            pl.BlockSpec((block_n, D, 4 * H), lambda n: (n, 0, 0)),     # W_i2h
            pl.BlockSpec((block_n, H, 4 * H), lambda n: (n, 0, 0)),     # W_h2h
        ],
        out_specs=[
            pl.BlockSpec((B, block_n * H), lambda n: (0, n)),           # h_t
            pl.BlockSpec((B, block_n * H), lambda n: (0, n)),           # c_t
        ],
        out_shape=(
            jax.ShapeDtypeStruct((B, N * H), h.dtype),
            jax.ShapeDtypeStruct((B, N * H), c.dtype),
        ),
        compiler_params=pltpu.CompilerParams(
            dimension_semantics=("parallel",),
            vmem_limit_bytes=32 * 1024 * 1024,
        ),
        cost_estimate=cost,
    )(x, h, c, w_i2h, w_h2h)

    # Contiguous reshape back to the module's (B, N, H) layout — free (no
    # data movement), unlike the transposes this version removed.
    return h_flat.reshape(B, N, H), c_flat.reshape(B, N, H)


def group_lstm_cell_ref(x, h, c, w_i2h, w_h2h):
    """Pure-JAX reference matching the PyTorch module exactly."""
    H = h.shape[-1]
    preact = jnp.einsum("bnd,ndf->bnf", x, w_i2h) + jnp.einsum(
        "bnh,nhf->bnf", h, w_h2h
    )
    gates = jax.nn.sigmoid(preact[:, :, : 3 * H])
    g_t = jnp.tanh(preact[:, :, 3 * H:])
    i_t = gates[:, :, :H]
    f_t = gates[:, :, H:2 * H]
    o_t = gates[:, :, -H:]
    c_t = c * f_t + i_t * g_t
    h_t = o_t * jnp.tanh(c_t)
    return h_t, c_t


if __name__ == "__main__":
    # Small shapes consistent with the module's forward signature.
    batch = 2
    num_lstms = 4
    inp_size = 16
    hidden_size = 32

    key = jax.random.PRNGKey(0)
    kx, kh, kc, kwi, kwh = jax.random.split(key, 5)

    x = jax.random.normal(kx, (batch, num_lstms, inp_size), dtype=jnp.float32)
    h0 = jax.random.normal(kh, (batch, num_lstms, hidden_size), dtype=jnp.float32)
    c0 = jax.random.normal(kc, (batch, num_lstms, hidden_size), dtype=jnp.float32)

    # reset_parameters(): uniform(-stdv, stdv), stdv = 1/sqrt(hidden_size)
    stdv = 1.0 / math.sqrt(hidden_size)
    w_i2h = jax.random.uniform(
        kwi, (num_lstms, inp_size, 4 * hidden_size),
        minval=-stdv, maxval=stdv, dtype=jnp.float32)
    w_h2h = jax.random.uniform(
        kwh, (num_lstms, hidden_size, 4 * hidden_size),
        minval=-stdv, maxval=stdv, dtype=jnp.float32)

    h_t, c_t = group_lstm_cell(x, h0, c0, w_i2h, w_h2h)
    jax.block_until_ready((h_t, c_t))

    h_ref, c_ref = group_lstm_cell_ref(x, h0, c0, w_i2h, w_h2h)
    np.testing.assert_allclose(np.asarray(h_t), np.asarray(h_ref), atol=1e-5, rtol=1e-5)
    np.testing.assert_allclose(np.asarray(c_t), np.asarray(c_ref), atol=1e-5, rtol=1e-5)

    print("KERNEL_OK")
</pallas_src>

<mosaic_0001>
module attributes {stable_mosaic.version = 11 : i64} {
  func.func @_group_lstm_kernel(%arg0: i32, %arg1: memref<2x4x16xf32, #tpu.memory_space<vmem>>, %arg2: memref<2x4x32xf32, #tpu.memory_space<vmem>>, %arg3: memref<2x4x32xf32, #tpu.memory_space<vmem>>, %arg4: memref<4x16x128xf32, #tpu.memory_space<vmem>>, %arg5: memref<4x32x128xf32, #tpu.memory_space<vmem>>, %arg6: memref<2x128xf32, #tpu.memory_space<vmem>>, %arg7: memref<2x128xf32, #tpu.memory_space<vmem>>) attributes {dimension_semantics = [#tpu.dimension_semantics<parallel>], iteration_bounds = array<i64: 1>, scalar_prefetch = 0 : i64, scratch_operands = 0 : i64, tpu.core_type = #tpu.core_type<tc>, window_params = [{transform_indices = @transform_0, window_bounds = array<i64: 2, 4, 16>}, {transform_indices = @transform_1, window_bounds = array<i64: 2, 4, 32>}, {transform_indices = @transform_2, window_bounds = array<i64: 2, 4, 32>}, {transform_indices = @transform_3, window_bounds = array<i64: 4, 16, 128>}, {transform_indices = @transform_4, window_bounds = array<i64: 4, 32, 128>}, {transform_indices = @transform_5, window_bounds = array<i64: 2, 128>}, {transform_indices = @transform_6, window_bounds = array<i64: 2, 128>}]} {
    %c0 = arith.constant 0 : index
    %c0_0 = arith.constant 0 : index
    %c0_1 = arith.constant 0 : index
    %0 = vector.load %arg1[%c0, %c0_0, %c0_1] : memref<2x4x16xf32, #tpu.memory_space<vmem>>, vector<2x4x16xf32>
    %c0_2 = arith.constant 0 : index
    %c0_3 = arith.constant 0 : index
    %c0_4 = arith.constant 0 : index
    %1 = vector.load %arg2[%c0_2, %c0_3, %c0_4] : memref<2x4x32xf32, #tpu.memory_space<vmem>>, vector<2x4x32xf32>
    %c0_5 = arith.constant 0 : index
    %c0_6 = arith.constant 0 : index
    %c0_7 = arith.constant 0 : index
    %2 = vector.load %arg3[%c0_5, %c0_6, %c0_7] : memref<2x4x32xf32, #tpu.memory_space<vmem>>, vector<2x4x32xf32>
    %3 = vector.extract_strided_slice %0 {offsets = [0, 0, 0], sizes = [2, 1, 16], strides = [1, 1, 1]} : vector<2x4x16xf32> to vector<2x1x16xf32>
    %4 = vector.shape_cast %3 : vector<2x1x16xf32> to vector<2x16xf32>
    %c0_8 = arith.constant 0 : index
    %c0_9 = arith.constant 0 : index
    %c0_10 = arith.constant 0 : index
    %5 = vector.load %arg4[%c0_8, %c0_9, %c0_10] : memref<4x16x128xf32, #tpu.memory_space<vmem>>, vector<1x16x128xf32>
    %6 = vector.shape_cast %5 : vector<1x16x128xf32> to vector<16x128xf32>
    %cst = arith.constant dense<0.000000e+00> : vector<2x128xf32>
    %7 = tpu.matmul %4, %6, %cst {dimension_numbers = #tpu.dot_dimension_numbers<[1], [0], [0], [1], [0, 0, 1, 1], [], []>} : vector<2x16xf32>, vector<16x128xf32>, vector<2x128xf32> -> vector<2x128xf32>
    %8 = vector.extract_strided_slice %1 {offsets = [0, 0, 0], sizes = [2, 1, 32], strides = [1, 1, 1]} : vector<2x4x32xf32> to vector<2x1x32xf32>
    %9 = vector.shape_cast %8 : vector<2x1x32xf32> to vector<2x32xf32>
    %c0_11 = arith.constant 0 : index
    %c0_12 = arith.constant 0 : index
    %c0_13 = arith.constant 0 : index
    %10 = vector.load %arg5[%c0_11, %c0_12, %c0_13] : memref<4x32x128xf32, #tpu.memory_space<vmem>>, vector<1x32x128xf32>
    %11 = vector.shape_cast %10 : vector<1x32x128xf32> to vector<32x128xf32>
    %cst_14 = arith.constant dense<0.000000e+00> : vector<2x128xf32>
    %12 = tpu.matmul %9, %11, %cst_14 {dimension_numbers = #tpu.dot_dimension_numbers<[1], [0], [0], [1], [0, 0, 1, 1], [], []>} : vector<2x32xf32>, vector<32x128xf32>, vector<2x128xf32> -> vector<2x128xf32>
    %13 = arith.addf %7, %12 : vector<2x128xf32>
    %14 = vector.extract_strided_slice %13 {offsets = [0, 0], sizes = [2, 32], strides = [1, 1]} : vector<2x128xf32> to vector<2x32xf32>
    %15 = arith.negf %14 : vector<2x32xf32>
    %16 = math.exp %15 : vector<2x32xf32>
    %cst_15 = arith.constant 1.000000e+00 : f32
    %17 = vector.broadcast %cst_15 : f32 to vector<2x32xf32>
    %18 = arith.addf %17, %16 : vector<2x32xf32>
    %19 = arith.divf %17, %18 : vector<2x32xf32>
    %20 = vector.extract_strided_slice %13 {offsets = [0, 32], sizes = [2, 32], strides = [1, 1]} : vector<2x128xf32> to vector<2x32xf32>
    %21 = arith.negf %20 : vector<2x32xf32>
    %22 = math.exp %21 : vector<2x32xf32>
    %cst_16 = arith.constant 1.000000e+00 : f32
    %23 = vector.broadcast %cst_16 : f32 to vector<2x32xf32>
    %24 = arith.addf %23, %22 : vector<2x32xf32>
    %25 = arith.divf %23, %24 : vector<2x32xf32>
    %26 = vector.extract_strided_slice %13 {offsets = [0, 64], sizes = [2, 32], strides = [1, 1]} : vector<2x128xf32> to vector<2x32xf32>
    %27 = arith.negf %26 : vector<2x32xf32>
    %28 = math.exp %27 : vector<2x32xf32>
    %cst_17 = arith.constant 1.000000e+00 : f32
    %29 = vector.broadcast %cst_17 : f32 to vector<2x32xf32>
    %30 = arith.addf %29, %28 : vector<2x32xf32>
    %31 = arith.divf %29, %30 : vector<2x32xf32>
    %32 = vector.extract_strided_slice %13 {offsets = [0, 96], sizes = [2, 32], strides = [1, 1]} : vector<2x128xf32> to vector<2x32xf32>
    %33 = math.tanh %32 : vector<2x32xf32>
    %34 = vector.extract_strided_slice %2 {offsets = [0, 0, 0], sizes = [2, 1, 32], strides = [1, 1, 1]} : vector<2x4x32xf32> to vector<2x1x32xf32>
    %35 = vector.shape_cast %34 : vector<2x1x32xf32> to vector<2x32xf32>
    %36 = arith.mulf %35, %25 : vector<2x32xf32>
    %37 = arith.mulf %19, %33 : vector<2x32xf32>
    %38 = arith.addf %36, %37 : vector<2x32xf32>
    %39 = math.tanh %38 : vector<2x32xf32>
    %40 = arith.mulf %31, %39 : vector<2x32xf32>
    %c0_18 = arith.constant 0 : index
    %c0_19 = arith.constant 0 : index
    %41 = vector.load %arg6[%c0_18, %c0_19] : memref<2x128xf32, #tpu.memory_space<vmem>>, vector<2x32xf32>
    tpu.vector_store %arg6[%c0_18, %c0_19], %40 {strides = array<i32>} : memref<2x128xf32, #tpu.memory_space<vmem>>, vector<2x32xf32>,
    %c0_20 = arith.constant 0 : index
    %c0_21 = arith.constant 0 : index
    %42 = vector.load %arg7[%c0_20, %c0_21] : memref<2x128xf32, #tpu.memory_space<vmem>>, vector<2x32xf32>
    tpu.vector_store %arg7[%c0_20, %c0_21], %38 {strides = array<i32>} : memref<2x128xf32, #tpu.memory_space<vmem>>, vector<2x32xf32>,
    %43 = vector.extract_strided_slice %0 {offsets = [0, 1, 0], sizes = [2, 1, 16], strides = [1, 1, 1]} : vector<2x4x16xf32> to vector<2x1x16xf32>
    %44 = vector.shape_cast %43 : vector<2x1x16xf32> to vector<2x16xf32>
    %c1 = arith.constant 1 : index
    %c0_22 = arith.constant 0 : index
    %c0_23 = arith.constant 0 : index
    %45 = vector.load %arg4[%c1, %c0_22, %c0_23] : memref<4x16x128xf32, #tpu.memory_space<vmem>>, vector<1x16x128xf32>
    %46 = vector.shape_cast %45 : vector<1x16x128xf32> to vector<16x128xf32>
    %cst_24 = arith.constant dense<0.000000e+00> : vector<2x128xf32>
    %47 = tpu.matmul %44, %46, %cst_24 {dimension_numbers = #tpu.dot_dimension_numbers<[1], [0], [0], [1], [0, 0, 1, 1], [], []>} : vector<2x16xf32>, vector<16x128xf32>, vector<2x128xf32> -> vector<2x128xf32>
    %48 = vector.extract_strided_slice %1 {offsets = [0, 1, 0], sizes = [2, 1, 32], strides = [1, 1, 1]} : vector<2x4x32xf32> to vector<2x1x32xf32>
    %49 = vector.shape_cast %48 : vector<2x1x32xf32> to vector<2x32xf32>
    %c1_25 = arith.constant 1 : index
    %c0_26 = arith.constant 0 : index
    %c0_27 = arith.constant 0 : index
    %50 = vector.load %arg5[%c1_25, %c0_26, %c0_27] : memref<4x32x128xf32, #tpu.memory_space<vmem>>, vector<1x32x128xf32>
    %51 = vector.shape_cast %50 : vector<1x32x128xf32> to vector<32x128xf32>
    %cst_28 = arith.constant dense<0.000000e+00> : vector<2x128xf32>
    %52 = tpu.matmul %49, %51, %cst_28 {dimension_numbers = #tpu.dot_dimension_numbers<[1], [0], [0], [1], [0, 0, 1, 1], [], []>} : vector<2x32xf32>, vector<32x128xf32>, vector<2x128xf32> -> vector<2x128xf32>
    %53 = arith.addf %47, %52 : vector<2x128xf32>
    %54 = vector.extract_strided_slice %53 {offsets = [0, 0], sizes = [2, 32], strides = [1, 1]} : vector<2x128xf32> to vector<2x32xf32>
    %55 = arith.negf %54 : vector<2x32xf32>
    %56 = math.exp %55 : vector<2x32xf32>
    %cst_29 = arith.constant 1.000000e+00 : f32
    %57 = vector.broadcast %cst_29 : f32 to vector<2x32xf32>
    %58 = arith.addf %57, %56 : vector<2x32xf32>
    %59 = arith.divf %57, %58 : vector<2x32xf32>
    %60 = vector.extract_strided_slice %53 {offsets = [0, 32], sizes = [2, 32], strides = [1, 1]} : vector<2x128xf32> to vector<2x32xf32>
    %61 = arith.negf %60 : vector<2x32xf32>
    %62 = math.exp %61 : vector<2x32xf32>
    %cst_30 = arith.constant 1.000000e+00 : f32
    %63 = vector.broadcast %cst_30 : f32 to vector<2x32xf32>
    %64 = arith.addf %63, %62 : vector<2x32xf32>
    %65 = arith.divf %63, %64 : vector<2x32xf32>
    %66 = vector.extract_strided_slice %53 {offsets = [0, 64], sizes = [2, 32], strides = [1, 1]} : vector<2x128xf32> to vector<2x32xf32>
    %67 = arith.negf %66 : vector<2x32xf32>
    %68 = math.exp %67 : vector<2x32xf32>
    %cst_31 = arith.constant 1.000000e+00 : f32
    %69 = vector.broadcast %cst_31 : f32 to vector<2x32xf32>
    %70 = arith.addf %69, %68 : vector<2x32xf32>
    %71 = arith.divf %69, %70 : vector<2x32xf32>
    %72 = vector.extract_strided_slice %53 {offsets = [0, 96], sizes = [2, 32], strides = [1, 1]} : vector<2x128xf32> to vector<2x32xf32>
    %73 = math.tanh %72 : vector<2x32xf32>
    %74 = vector.extract_strided_slice %2 {offsets = [0, 1, 0], sizes = [2, 1, 32], strides = [1, 1, 1]} : vector<2x4x32xf32> to vector<2x1x32xf32>
    %75 = vector.shape_cast %74 : vector<2x1x32xf32> to vector<2x32xf32>
    %76 = arith.mulf %75, %65 : vector<2x32xf32>
    %77 = arith.mulf %59, %73 : vector<2x32xf32>
    %78 = arith.addf %76, %77 : vector<2x32xf32>
    %79 = math.tanh %78 : vector<2x32xf32>
    %80 = arith.mulf %71, %79 : vector<2x32xf32>
    %c0_32 = arith.constant 0 : index
    %c32 = arith.constant 32 : index
    %81 = vector.load %arg6[%c0_32, %c32] : memref<2x128xf32, #tpu.memory_space<vmem>>, vector<2x32xf32>
    tpu.vector_store %arg6[%c0_32, %c32], %80 {strides = array<i32>} : memref<2x128xf32, #tpu.memory_space<vmem>>, vector<2x32xf32>,
    %c0_33 = arith.constant 0 : index
    %c32_34 = arith.constant 32 : index
    %82 = vector.load %arg7[%c0_33, %c32_34] : memref<2x128xf32, #tpu.memory_space<vmem>>, vector<2x32xf32>
    tpu.vector_store %arg7[%c0_33, %c32_34], %78 {strides = array<i32>} : memref<2x128xf32, #tpu.memory_space<vmem>>, vector<2x32xf32>,
    %83 = vector.extract_strided_slice %0 {offsets = [0, 2, 0], sizes = [2, 1, 16], strides = [1, 1, 1]} : vector<2x4x16xf32> to vector<2x1x16xf32>
    %84 = vector.shape_cast %83 : vector<2x1x16xf32> to vector<2x16xf32>
    %c2 = arith.constant 2 : index
    %c0_35 = arith.constant 0 : index
    %c0_36 = arith.constant 0 : index
    %85 = vector.load %arg4[%c2, %c0_35, %c0_36] : memref<4x16x128xf32, #tpu.memory_space<vmem>>, vector<1x16x128xf32>
    %86 = vector.shape_cast %85 : vector<1x16x128xf32> to vector<16x128xf32>
    %cst_37 = arith.constant dense<0.000000e+00> : vector<2x128xf32>
    %87 = tpu.matmul %84, %86, %cst_37 {dimension_numbers = #tpu.dot_dimension_numbers<[1], [0], [0], [1], [0, 0, 1, 1], [], []>} : vector<2x16xf32>, vector<16x128xf32>, vector<2x128xf32> -> vector<2x128xf32>
    %88 = vector.extract_strided_slice %1 {offsets = [0, 2, 0], sizes = [2, 1, 32], strides = [1, 1, 1]} : vector<2x4x32xf32> to vector<2x1x32xf32>
    %89 = vector.shape_cast %88 : vector<2x1x32xf32> to vector<2x32xf32>
    %c2_38 = arith.constant 2 : index
    %c0_39 = arith.constant 0 : index
    %c0_40 = arith.constant 0 : index
    %90 = vector.load %arg5[%c2_38, %c0_39, %c0_40] : memref<4x32x128xf32, #tpu.memory_space<vmem>>, vector<1x32x128xf32>
    %91 = vector.shape_cast %90 : vector<1x32x128xf32> to vector<32x128xf32>
    %cst_41 = arith.constant dense<0.000000e+00> : vector<2x128xf32>
    %92 = tpu.matmul %89, %91, %cst_41 {dimension_numbers = #tpu.dot_dimension_numbers<[1], [0], [0], [1], [0, 0, 1, 1], [], []>} : vector<2x32xf32>, vector<32x128xf32>, vector<2x128xf32> -> vector<2x128xf32>
    %93 = arith.addf %87, %92 : vector<2x128xf32>
    %94 = vector.extract_strided_slice %93 {offsets = [0, 0], sizes = [2, 32], strides = [1, 1]} : vector<2x128xf32> to vector<2x32xf32>
    %95 = arith.negf %94 : vector<2x32xf32>
    %96 = math.exp %95 : vector<2x32xf32>
    %cst_42 = arith.constant 1.000000e+00 : f32
    %97 = vector.broadcast %cst_42 : f32 to vector<2x32xf32>
    %98 = arith.addf %97, %96 : vector<2x32xf32>
    %99 = arith.divf %97, %98 : vector<2x32xf32>
    %100 = vector.extract_strided_slice %93 {offsets = [0, 32], sizes = [2, 32], strides = [1, 1]} : vector<2x128xf32> to vector<2x32xf32>
    %101 = arith.negf %100 : vector<2x32xf32>
    %102 = math.exp %101 : vector<2x32xf32>
    %cst_43 = arith.constant 1.000000e+00 : f32
    %103 = vector.broadcast %cst_43 : f32 to vector<2x32xf32>
    %104 = arith.addf %103, %102 : vector<2x32xf32>
    %105 = arith.divf %103, %104 : vector<2x32xf32>
    %106 = vector.extract_strided_slice %93 {offsets = [0, 64], sizes = [2, 32], strides = [1, 1]} : vector<2x128xf32> to vector<2x32xf32>
    %107 = arith.negf %106 : vector<2x32xf32>
    %108 = math.exp %107 : vector<2x32xf32>
    %cst_44 = arith.constant 1.000000e+00 : f32
    %109 = vector.broadcast %cst_44 : f32 to vector<2x32xf32>
    %110 = arith.addf %109, %108 : vector<2x32xf32>
    %111 = arith.divf %109, %110 : vector<2x32xf32>
    %112 = vector.extract_strided_slice %93 {offsets = [0, 96], sizes = [2, 32], strides = [1, 1]} : vector<2x128xf32> to vector<2x32xf32>
    %113 = math.tanh %112 : vector<2x32xf32>
    %114 = vector.extract_strided_slice %2 {offsets = [0, 2, 0], sizes = [2, 1, 32], strides = [1, 1, 1]} : vector<2x4x32xf32> to vector<2x1x32xf32>
    %115 = vector.shape_cast %114 : vector<2x1x32xf32> to vector<2x32xf32>
    %116 = arith.mulf %115, %105 : vector<2x32xf32>
    %117 = arith.mulf %99, %113 : vector<2x32xf32>
    %118 = arith.addf %116, %117 : vector<2x32xf32>
    %119 = math.tanh %118 : vector<2x32xf32>
    %120 = arith.mulf %111, %119 : vector<2x32xf32>
    %c0_45 = arith.constant 0 : index
    %c64 = arith.constant 64 : index
    %121 = vector.load %arg6[%c0_45, %c64] : memref<2x128xf32, #tpu.memory_space<vmem>>, vector<2x32xf32>
    tpu.vector_store %arg6[%c0_45, %c64], %120 {strides = array<i32>} : memref<2x128xf32, #tpu.memory_space<vmem>>, vector<2x32xf32>,
    %c0_46 = arith.constant 0 : index
    %c64_47 = arith.constant 64 : index
    %122 = vector.load %arg7[%c0_46, %c64_47] : memref<2x128xf32, #tpu.memory_space<vmem>>, vector<2x32xf32>
    tpu.vector_store %arg7[%c0_46, %c64_47], %118 {strides = array<i32>} : memref<2x128xf32, #tpu.memory_space<vmem>>, vector<2x32xf32>,
    %123 = vector.extract_strided_slice %0 {offsets = [0, 3, 0], sizes = [2, 1, 16], strides = [1, 1, 1]} : vector<2x4x16xf32> to vector<2x1x16xf32>
    %124 = vector.shape_cast %123 : vector<2x1x16xf32> to vector<2x16xf32>
    %c3 = arith.constant 3 : index
    %c0_48 = arith.constant 0 : index
    %c0_49 = arith.constant 0 : index
    %125 = vector.load %arg4[%c3, %c0_48, %c0_49] : memref<4x16x128xf32, #tpu.memory_space<vmem>>, vector<1x16x128xf32>
    %126 = vector.shape_cast %125 : vector<1x16x128xf32> to vector<16x128xf32>
    %cst_50 = arith.constant dense<0.000000e+00> : vector<2x128xf32>
    %127 = tpu.matmul %124, %126, %cst_50 {dimension_numbers = #tpu.dot_dimension_numbers<[1], [0], [0], [1], [0, 0, 1, 1], [], []>} : vector<2x16xf32>, vector<16x128xf32>, vector<2x128xf32> -> vector<2x128xf32>
    %128 = vector.extract_strided_slice %1 {offsets = [0, 3, 0], sizes = [2, 1, 32], strides = [1, 1, 1]} : vector<2x4x32xf32> to vector<2x1x32xf32>
    %129 = vector.shape_cast %128 : vector<2x1x32xf32> to vector<2x32xf32>
    %c3_51 = arith.constant 3 : index
    %c0_52 = arith.constant 0 : index
    %c0_53 = arith.constant 0 : index
    %130 = vector.load %arg5[%c3_51, %c0_52, %c0_53] : memref<4x32x128xf32, #tpu.memory_space<vmem>>, vector<1x32x128xf32>
    %131 = vector.shape_cast %130 : vector<1x32x128xf32> to vector<32x128xf32>
    %cst_54 = arith.constant dense<0.000000e+00> : vector<2x128xf32>
    %132 = tpu.matmul %129, %131, %cst_54 {dimension_numbers = #tpu.dot_dimension_numbers<[1], [0], [0], [1], [0, 0, 1, 1], [], []>} : vector<2x32xf32>, vector<32x128xf32>, vector<2x128xf32> -> vector<2x128xf32>
    %133 = arith.addf %127, %132 : vector<2x128xf32>
    %134 = vector.extract_strided_slice %133 {offsets = [0, 0], sizes = [2, 32], strides = [1, 1]} : vector<2x128xf32> to vector<2x32xf32>
    %135 = arith.negf %134 : vector<2x32xf32>
    %136 = math.exp %135 : vector<2x32xf32>
    %cst_55 = arith.constant 1.000000e+00 : f32
    %137 = vector.broadcast %cst_55 : f32 to vector<2x32xf32>
    %138 = arith.addf %137, %136 : vector<2x32xf32>
    %139 = arith.divf %137, %138 : vector<2x32xf32>
    %140 = vector.extract_strided_slice %133 {offsets = [0, 32], sizes = [2, 32], strides = [1, 1]} : vector<2x128xf32> to vector<2x32xf32>
    %141 = arith.negf %140 : vector<2x32xf32>
    %142 = math.exp %141 : vector<2x32xf32>
    %cst_56 = arith.constant 1.000000e+00 : f32
    %143 = vector.broadcast %cst_56 : f32 to vector<2x32xf32>
    %144 = arith.addf %143, %142 : vector<2x32xf32>
    %145 = arith.divf %143, %144 : vector<2x32xf32>
    %146 = vector.extract_strided_slice %133 {offsets = [0, 64], sizes = [2, 32], strides = [1, 1]} : vector<2x128xf32> to vector<2x32xf32>
    %147 = arith.negf %146 : vector<2x32xf32>
    %148 = math.exp %147 : vector<2x32xf32>
    %cst_57 = arith.constant 1.000000e+00 : f32
    %149 = vector.broadcast %cst_57 : f32 to vector<2x32xf32>
    %150 = arith.addf %149, %148 : vector<2x32xf32>
    %151 = arith.divf %149, %150 : vector<2x32xf32>
    %152 = vector.extract_strided_slice %133 {offsets = [0, 96], sizes = [2, 32], strides = [1, 1]} : vector<2x128xf32> to vector<2x32xf32>
    %153 = math.tanh %152 : vector<2x32xf32>
    %154 = vector.extract_strided_slice %2 {offsets = [0, 3, 0], sizes = [2, 1, 32], strides = [1, 1, 1]} : vector<2x4x32xf32> to vector<2x1x32xf32>
    %155 = vector.shape_cast %154 : vector<2x1x32xf32> to vector<2x32xf32>
    %156 = arith.mulf %155, %145 : vector<2x32xf32>
    %157 = arith.mulf %139, %153 : vector<2x32xf32>
    %158 = arith.addf %156, %157 : vector<2x32xf32>
    %159 = math.tanh %158 : vector<2x32xf32>
    %160 = arith.mulf %151, %159 : vector<2x32xf32>
    %c0_58 = arith.constant 0 : index
    %c96 = arith.constant 96 : index
    %161 = vector.load %arg6[%c0_58, %c96] : memref<2x128xf32, #tpu.memory_space<vmem>>, vector<2x32xf32>
    tpu.vector_store %arg6[%c0_58, %c96], %160 {strides = array<i32>} : memref<2x128xf32, #tpu.memory_space<vmem>>, vector<2x32xf32>,
    %c0_59 = arith.constant 0 : index
    %c96_60 = arith.constant 96 : index
    %162 = vector.load %arg7[%c0_59, %c96_60] : memref<2x128xf32, #tpu.memory_space<vmem>>, vector<2x32xf32>
    tpu.vector_store %arg7[%c0_59, %c96_60], %158 {strides = array<i32>} : memref<2x128xf32, #tpu.memory_space<vmem>>, vector<2x32xf32>,
    return
  }
  func.func @transform_0(%arg0: i32) -> (i32, i32, i32) {
    %c0_i32 = arith.constant 0 : i32
    %c0_i32_0 = arith.constant 0 : i32
    %c0_i32_1 = arith.constant 0 : i32
    return %c0_i32, %arg0, %c0_i32_0 : i32, i32, i32
  }
  func.func @transform_1(%arg0: i32) -> (i32, i32, i32) {
    %c0_i32 = arith.constant 0 : i32
    %c0_i32_0 = arith.constant 0 : i32
    %c0_i32_1 = arith.constant 0 : i32
    return %c0_i32, %arg0, %c0_i32_0 : i32, i32, i32
  }
  func.func @transform_2(%arg0: i32) -> (i32, i32, i32) {
    %c0_i32 = arith.constant 0 : i32
    %c0_i32_0 = arith.constant 0 : i32
    %c0_i32_1 = arith.constant 0 : i32
    return %c0_i32, %arg0, %c0_i32_0 : i32, i32, i32
  }
  func.func @transform_3(%arg0: i32) -> (i32, i32, i32) {
    %c0_i32 = arith.constant 0 : i32
    %c0_i32_0 = arith.constant 0 : i32
    %c0_i32_1 = arith.constant 0 : i32
    return %arg0, %c0_i32, %c0_i32_0 : i32, i32, i32
  }
  func.func @transform_4(%arg0: i32) -> (i32, i32, i32) {
    %c0_i32 = arith.constant 0 : i32
    %c0_i32_0 = arith.constant 0 : i32
    %c0_i32_1 = arith.constant 0 : i32
    return %arg0, %c0_i32, %c0_i32_0 : i32, i32, i32
  }
  func.func @transform_5(%arg0: i32) -> (i32, i32) {
    %c0_i32 = arith.constant 0 : i32
    %c0_i32_0 = arith.constant 0 : i32
    return %c0_i32, %arg0 : i32, i32
  }
  func.func @transform_6(%arg0: i32) -> (i32, i32) {
    %c0_i32 = arith.constant 0 : i32
    %c0_i32_0 = arith.constant 0 : i32
    return %c0_i32, %arg0 : i32, i32
  }
}

</mosaic_0001>

<llo_original>
// kernel: tpu_custom_call.1
$region0: #{tpu_custom_call.1}
  #allocation0 [shape = 'u32[]', space=smem, size = 0x4, offset = 0x4, fixed_abs, tag = 'smem constant byte address 0x4 - core index']
  #allocation1 [shape = 'u32[144,128]{1,0:T(1,128)}', space=vmem, size = 0x12000, scoped, tag = 'internal scratch']
  %s0 = inlined_call_operand.hbm [shape: f32[2,4,16], index: 0, kind: input, shape index: {}]
  %s1 = inlined_call_operand.hbm [shape: f32[2,4,32], index: 1, kind: input, shape index: {}]
  %s2 = inlined_call_operand.hbm [shape: f32[2,4,32], index: 2, kind: input, shape index: {}]
  %s3 = inlined_call_operand.hbm [shape: f32[4,16,128], index: 3, kind: input, shape index: {}]
  %s4 = inlined_call_operand.hbm [shape: f32[4,32,128], index: 4, kind: input, shape index: {}]
  %s5 = inlined_call_operand.hbm [shape: f32[2,128], index: 5, kind: output, shape index: {0}]
  %s6 = inlined_call_operand.hbm [shape: f32[2,128], index: 6, kind: output, shape index: {1}]
  %7 = xla_tuple %s5, %s6
  %s8 = sld [smem:[#allocation0]]
  $region58: #{tpu_custom_call.1} parent=0
    _
  %s10 = ssub.s32 1, %s8
  %s11 = scalar_select 0, %s10, %s8
  $region1: #{tpu_custom_call.1} parent=0
    #allocation2 [shape = 'u8[4096]{0}', space=vmem, size = 0x1000, scoped, tag = 'input window, operand 0, single buffered']
    #allocation3 [shape = 's32[1]{0}', space=sflag, size = 0x4, scoped, tag = 'scoped memory for tpu_custom_call.1']
    #allocation4 [shape = 's32[1]{0}', space=sflag, size = 0x4, scoped, tag = 'scoped memory for tpu_custom_call.1']
    #allocation5 [shape = 'u8[4096]{0}', space=vmem, size = 0x1000, scoped, tag = 'input window, operand 1, single buffered']
    #allocation6 [shape = 's32[1]{0}', space=sflag, size = 0x4, scoped, tag = 'scoped memory for tpu_custom_call.1']
    #allocation7 [shape = 'u8[4096]{0}', space=vmem, size = 0x1000, scoped, tag = 'input window, operand 2, single buffered']
    #allocation8 [shape = 'u8[32768]{0}', space=vmem, size = 0x8000, scoped, tag = 'input window, operand 3, single buffered']
    #allocation9 [shape = 's32[1]{0}', space=sflag, size = 0x4, scoped, tag = 'scoped memory for tpu_custom_call.1']
    #allocation10 [shape = 'u8[65536]{0}', space=vmem, size = 0x10000, scoped, tag = 'input window, operand 4, single buffered']
    #allocation11 [shape = 'u8[1024]{0}', space=vmem, size = 0x400, scoped, tag = 'output window, operand 0, single buffered']
    #allocation12 [shape = 'u8[1024]{0}', space=vmem, size = 0x400, scoped, tag = 'output window, operand 1, single buffered']
    #allocation13 [shape = 's32[1]{0}', space=sflag, size = 0x4, scoped, tag = 'scoped memory for tpu_custom_call.1']
    %12 = vsyncpa [#allocation3], 0
    %13 = vsyncpa [#allocation6], 0
    %14 = vsyncpa [#allocation9], 0
    %15 = vsyncpa [#allocation4], 0
    %16 = vsyncpa [#allocation13], 0
    // Predicated region
    $region2: #{tpu_custom_call.1} parent=1 // pred_check
      _
    $region3: #{tpu_custom_call.1} parent=1 // pred_check_branch
      %18 = sbr.rel (0) target = $region5
    $region4: #{tpu_custom_call.1} parent=1 // pred_region
      %s20 = ssub.s32 128, 128
      %21 = vsyncadd [#allocation3], %s20
      %s22 = sshll.u32 [#allocation2], 4
      %s23 = int_to_ptr.vmem [resolvable:$true] %s22
      %28 = dma.hbm_to_vmem [thread:$0]  %s0, 128, %s23, [#allocation3], 64, 64, 4
    $region5: #{tpu_custom_call.1} parent=1 // pred_fallthru
      _
    // Predicated region
    $region6: #{tpu_custom_call.1} parent=1 // pred_check
      _
    $region7: #{tpu_custom_call.1} parent=1 // pred_check_branch
      %30 = sbr.rel (0) target = $region9
    $region8: #{tpu_custom_call.1} parent=1 // pred_region
      %s32 = ssub.s32 128, 128
      %33 = vsyncadd [#allocation6], %s32
      %s34 = sshll.u32 [#allocation5], 4
      %s35 = int_to_ptr.vmem [resolvable:$true] %s34
      %40 = dma.hbm_to_vmem [thread:$0]  %s1, 128, %s35, [#allocation6], 64, 64, 4
    $region9: #{tpu_custom_call.1} parent=1 // pred_fallthru
      _
    // Predicated region
    $region10: #{tpu_custom_call.1} parent=1 // pred_check
      _
    $region11: #{tpu_custom_call.1} parent=1 // pred_check_branch
      %42 = sbr.rel (0) target = $region13
    $region12: #{tpu_custom_call.1} parent=1 // pred_region
      %s44 = ssub.s32 128, 128
      %45 = vsyncadd [#allocation6], %s44
      %s46 = sshll.u32 [#allocation7], 4
      %s47 = int_to_ptr.vmem [resolvable:$true] %s46
      %52 = dma.hbm_to_vmem [thread:$0]  %s2, 128, %s47, [#allocation6], 64, 64, 4
    $region13: #{tpu_custom_call.1} parent=1 // pred_fallthru
      _
    // Predicated region
    $region14: #{tpu_custom_call.1} parent=1 // pred_check
      _
    $region15: #{tpu_custom_call.1} parent=1 // pred_check_branch
      %54 = sbr.rel (0) target = $region17
    $region16: #{tpu_custom_call.1} parent=1 // pred_region
      %s56 = ssub.s32 1024, 1024
      %57 = vsyncadd [#allocation9], %s56
      %s58 = sshll.u32 [#allocation8], 4
      %s59 = int_to_ptr.vmem [resolvable:$true] %s58
      %64 = dma.hbm_to_vmem [thread:$0]  %s3, 1024, %s59, [#allocation9], 128, 128, 8
    $region17: #{tpu_custom_call.1} parent=1 // pred_fallthru
      _
    // Predicated region
    $region18: #{tpu_custom_call.1} parent=1 // pred_check
      _
    $region19: #{tpu_custom_call.1} parent=1 // pred_check_branch
      %66 = sbr.rel (0) target = $region21
    $region20: #{tpu_custom_call.1} parent=1 // pred_region
      %s68 = ssub.s32 2048, 2048
      %69 = vsyncadd [#allocation9], %s68
      %s70 = sshll.u32 [#allocation10], 4
      %s71 = int_to_ptr.vmem [resolvable:$true] %s70
      %76 = dma.hbm_to_vmem [thread:$0]  %s4, 2048, %s71, [#allocation9], 128, 128, 8
    $region21: #{tpu_custom_call.1} parent=1 // pred_fallthru
      _
    // Predicated region
    $region22: #{tpu_custom_call.1} parent=1 // pred_check
      _
    $region23: #{tpu_custom_call.1} parent=1 // pred_check_branch
      %78 = sbr.rel (0) target = $region25
    $region24: #{tpu_custom_call.1} parent=1 // pred_region
      %79 = dma.done [#allocation3], 128
    $region25: #{tpu_custom_call.1} parent=1 // pred_fallthru
      _
    // Predicated region
    $region26: #{tpu_custom_call.1} parent=1 // pred_check
      _
    $region27: #{tpu_custom_call.1} parent=1 // pred_check_branch
      %81 = sbr.rel (0) target = $region29
    $region28: #{tpu_custom_call.1} parent=1 // pred_region
      %82 = dma.done [#allocation6], 128
    $region29: #{tpu_custom_call.1} parent=1 // pred_fallthru
      _
    // Predicated region
    $region30: #{tpu_custom_call.1} parent=1 // pred_check
      _
    $region31: #{tpu_custom_call.1} parent=1 // pred_check_branch
      %84 = sbr.rel (0) target = $region33
    $region32: #{tpu_custom_call.1} parent=1 // pred_region
      %85 = dma.done [#allocation6], 128
    $region33: #{tpu_custom_call.1} parent=1 // pred_fallthru
      _
    // Predicated region
    $region34: #{tpu_custom_call.1} parent=1 // pred_check
      _
    $region35: #{tpu_custom_call.1} parent=1 // pred_check_branch
      %87 = sbr.rel (0) target = $region37
    $region36: #{tpu_custom_call.1} parent=1 // pred_region
      %88 = dma.done [#allocation9], 1024
    $region37: #{tpu_custom_call.1} parent=1 // pred_fallthru
      _
    // Predicated region
    $region38: #{tpu_custom_call.1} parent=1 // pred_check
      _
    $region39: #{tpu_custom_call.1} parent=1 // pred_check_branch
      %90 = sbr.rel (0) target = $region41
    $region40: #{tpu_custom_call.1} parent=1 // pred_region
      %91 = dma.done [#allocation9], 2048
    $region41: #{tpu_custom_call.1} parent=1 // pred_fallthru
      _
    %v92 = vld [vmem:[#allocation2] sm:$0xf]
    %v93 = vld [vmem:[#allocation2 + $0x4] sm:$0xf]
    %v94 = vld [vmem:[#allocation5] sm:$0xf]
    %v95 = vld [vmem:[#allocation5 + $0x4] sm:$0xf]
    %v96 = vld [vmem:[#allocation7] sm:$0xf]
    %v97 = vld [vmem:[#allocation7 + $0x4] sm:$0xf]
    %v98 = vld [vmem:[#allocation8] sm:$0xff]
    %v99 = vld [vmem:[#allocation8 + $0x8] sm:$0xff]
    %v100 = vld [vmem:[#allocation10] sm:$0xff]
    %v101 = vld [vmem:[#allocation10 + $0x8] sm:$0xff]
    %v102 = vld [vmem:[#allocation10 + $0x10] sm:$0xff]
    %v103 = vld [vmem:[#allocation10 + $0x18] sm:$0xff]
    %v106 = vrot.slane %v95, 7
    %vm107 = vcmask 1041409
    %v108 = vsel %vm107, %v106, %v94
    %vm109 = vcmask 261120
    %v110 = vsel %vm109, %v108, 0
    %112 = vmatprep.subr.mxu0 0.0
    %113 = vmatpush1.msra.mxu0 %v100
    %114 = vmatprep.subr.mxu0 0.0
    %115 = vmatpush1.msra.mxu0 %v101
    %116 = vmatprep.subr.mxu0 0.0
    %117 = vmatpush1.msra.mxu0 %v102
    %118 = vmatprep.subr.mxu0 0.0
    %119 = vmatpush1.msra.mxu0 %v103
    %120 = vmatprep.subr.mxu0 0.0
    %121 = vmatpush1.msra.mxu0 0.0
    %122 = vmatprep.subr.mxu0 0.0
    %123 = vmatpush1.msra.mxu0 0.0
    %124 = vmatprep.subr.mxu0 0.0
    %125 = vmatpush1.msra.mxu0 0.0
    %126 = vmatprep.subr.mxu0 0.0
    %127 = vmatpush1.msra.mxu0 0.0
    %128 = vmatprep.subr.mxu0 0.0
    %129 = vmatpush1.msra.mxu0 0.0
    %130 = vmatprep.subr.mxu0 0.0
    %131 = vmatpush1.msra.mxu0 0.0
    %132 = vmatprep.subr.mxu0 0.0
    %133 = vmatpush1.msra.mxu0 0.0
    %134 = vmatprep.subr.mxu0 0.0
    %135 = vmatpush1.msra.mxu0 0.0
    %136 = vmatprep.subr.mxu0 0.0
    %137 = vmatpush1.msra.mxu0 0.0
    %138 = vmatprep.subr.mxu0 0.0
    %139 = vmatpush1.msra.mxu0 0.0
    %140 = vmatprep.subr.mxu0 0.0
    %141 = vmatpush1.msra.mxu0 0.0
    %142 = vmatprep.subr.mxu0 0.0
    %143 = vmatpush1.msra.mxu0 0.0
    %144 = vmatprep.subr.mxu0 0.0
    %145 = vmatpush1.msra.mxu0 0.0
    %146 = vmatprep.subr.mxu0 0.0
    %147 = vmatpush1.msra.mxu0 0.0
    %148 = vmatprep.subr.mxu0 0.0
    %149 = vmatpush1.msra.mxu0 0.0
    %150 = vmatprep.subr.mxu0 0.0
    %151 = vmatpush1.msra.mxu0 0.0
    %152 = vmatprep.subr.mxu0 0.0
    %153 = vmatpush1.msra.mxu0 0.0
    %154 = vmatprep.subr.mxu0 0.0
    %155 = vmatpush1.msra.mxu0 0.0
    %156 = vmatprep.subr.mxu0 0.0
    %157 = vmatpush1.msra.mxu0 0.0
    %158 = vmatprep.subr.mxu0 0.0
    %159 = vmatpush1.msra.mxu0 0.0
    %160 = vmatprep.subr.mxu0 0.0
    %161 = vmatpush1.msra.mxu0 0.0
    %162 = vmatprep.subr.mxu0 0.0
    %163 = vmatpush1.msra.mxu0 0.0
    %164 = vmatprep.subr.mxu0 0.0
    %165 = vmatpush1.msra.mxu0 0.0
    %166 = vmatprep.subr.mxu0 0.0
    %167 = vmatpush1.msra.mxu0 0.0
    %168 = vmatprep.subr.mxu0 0.0
    %169 = vmatpush1.msra.mxu0 0.0
    %170 = vmatprep.subr.mxu0 0.0
    %171 = vmatpush1.msra.mxu0 0.0
    %172 = vmatprep.subr.mxu0 0.0
    %173 = vmatpush1.msra.mxu0 0.0
    %174 = vmatprep.subr.mxu0 0.0
    %175 = vmatpush1.msra.mxu0 0.0
    %176 = vmatprep.mubr.f32.mxu0 0.0
    %177 = vmatmul.mubr.f32.gmra.mrb[0].mxu0 %v110
    %v178 = vpop.f32.mrb[0].mxu0
    %v179 = vadd.f32 0.0, %v178
    %v180 = vpop.f32.mrb[0].mxu0
    %181 = vdwg.mxu0
    %v184 = vrot.slane %v93, 7
    %v185 = vsel %vm107, %v184, %v92
    %vm186 = vcmask 130048
    %v187 = vsel %vm186, %v185, 0
    %189 = vmatprep.subr.mxu0 0.0
    %190 = vmatpush1.msra.mxu0 %v98
    %191 = vmatprep.subr.mxu0 0.0
    %192 = vmatpush1.msra.mxu0 %v99
    %193 = vmatprep.subr.mxu0 0.0
    %194 = vmatpush1.msra.mxu0 0.0
    %195 = vmatprep.subr.mxu0 0.0
    %196 = vmatpush1.msra.mxu0 0.0
    %197 = vmatprep.subr.mxu0 0.0
    %198 = vmatpush1.msra.mxu0 0.0
    %199 = vmatprep.subr.mxu0 0.0
    %200 = vmatpush1.msra.mxu0 0.0
    %201 = vmatprep.subr.mxu0 0.0
    %202 = vmatpush1.msra.mxu0 0.0
    %203 = vmatprep.subr.mxu0 0.0
    %204 = vmatpush1.msra.mxu0 0.0
    %205 = vmatprep.subr.mxu0 0.0
    %206 = vmatpush1.msra.mxu0 0.0
    %207 = vmatprep.subr.mxu0 0.0
    %208 = vmatpush1.msra.mxu0 0.0
    %209 = vmatprep.subr.mxu0 0.0
    %210 = vmatpush1.msra.mxu0 0.0
    %211 = vmatprep.subr.mxu0 0.0
    %212 = vmatpush1.msra.mxu0 0.0
    %213 = vmatprep.subr.mxu0 0.0
    %214 = vmatpush1.msra.mxu0 0.0
    %215 = vmatprep.subr.mxu0 0.0
    %216 = vmatpush1.msra.mxu0 0.0
    %217 = vmatprep.subr.mxu0 0.0
    %218 = vmatpush1.msra.mxu0 0.0
    %219 = vmatprep.subr.mxu0 0.0
    %220 = vmatpush1.msra.mxu0 0.0
    %221 = vmatprep.subr.mxu0 0.0
    %222 = vmatpush1.msra.mxu0 0.0
    %223 = vmatprep.subr.mxu0 0.0
    %224 = vmatpush1.msra.mxu0 0.0
    %225 = vmatprep.subr.mxu0 0.0
    %226 = vmatpush1.msra.mxu0 0.0
    %227 = vmatprep.subr.mxu0 0.0
    %228 = vmatpush1.msra.mxu0 0.0
    %229 = vmatprep.subr.mxu0 0.0
    %230 = vmatpush1.msra.mxu0 0.0
    %231 = vmatprep.subr.mxu0 0.0
    %232 = vmatpush1.msra.mxu0 0.0
    %233 = vmatprep.subr.mxu0 0.0
    %234 = vmatpush1.msra.mxu0 0.0
    %235 = vmatprep.subr.mxu0 0.0
    %236 = vmatpush1.msra.mxu0 0.0
    %237 = vmatprep.subr.mxu0 0.0
    %238 = vmatpush1.msra.mxu0 0.0
    %239 = vmatprep.subr.mxu0 0.0
    %240 = vmatpush1.msra.mxu0 0.0
    %241 = vmatprep.subr.mxu0 0.0
    %242 = vmatpush1.msra.mxu0 0.0
    %243 = vmatprep.subr.mxu0 0.0
    %244 = vmatpush1.msra.mxu0 0.0
    %245 = vmatprep.subr.mxu0 0.0
    %246 = vmatpush1.msra.mxu0 0.0
    %247 = vmatprep.subr.mxu0 0.0
    %248 = vmatpush1.msra.mxu0 0.0
    %249 = vmatprep.subr.mxu0 0.0
    %250 = vmatpush1.msra.mxu0 0.0
    %251 = vmatprep.subr.mxu0 0.0
    %252 = vmatpush1.msra.mxu0 0.0
    %253 = vmatprep.mubr.f32.mxu0 0.0
    %254 = vmatmul.mubr.f32.gmra.mrb[0].mxu0 %v187
    %v255 = vpop.f32.mrb[0].mxu0
    %v256 = vadd.f32 %v179, %v255
    %v257 = vpop.f32.mrb[0].mxu0
    %258 = vdwg.mxu0
    %v259 = vxor.u32 %v256, 2147483648
    %v260 = vmul.f32 %v259, 1.442695
    %v261 = vpow.pop %v260
    %v262 = vadd.f32 %v261, 1.0
    %v263 = vrcp.pop %v262
    %v264 = vmul.f32 1.0, %v263
    %v265 = vtanh.pop %v256
    %v267 = vrot.slane %v264, 1
    %268 = vrot.lane.b32.xlu0 %v264, 96
    %v269 = vpop.permute.xlu0 %268
    %270 = vrot.lane.b32.xlu0 %v267, 96
    %v271 = vpop.permute.xlu0 %270
    %v274 = vmul.f32 %v96, %v269
    %v275 = vmul.f32 %v97, %v271
    %277 = vrot.lane.b32.xlu0 %v265, 32
    %v278 = vpop.permute.xlu0 %277
    %v280 = vmul.f32 %v264, %v278
    %v282 = vrot.slane %v280, 1
    %v285 = vadd.f32 %v274, %v280
    %v286 = vadd.f32 %v275, %v282
    %v287 = vtanh.pop %v285
    %v288 = vtanh.pop %v286
    %v291 = vrot.slane %v288, 7
    %v292 = vsel %vm107, %v291, %v287
    %293 = vrot.lane.b32.xlu0 %v292, 64
    %v294 = vpop.permute.xlu0 %293
    %v296 = vmul.f32 %v264, %v294
    %298 = vrot.lane.b32.xlu0 %v296, 64
    %v299 = vpop.permute.xlu0 %298
    %vm301 = vcmask 254976
    %302 = vst.msk [vmem:[#allocation11] sm:$0x3] %vm301, %v299
    %v305 = vrot.slane %v286, 7
    %v306 = vsel %vm107, %v305, %v285
    %308 = vst.msk [vmem:[#allocation12] sm:$0x3] %vm301, %v306
    %s309 = scalar_lea.vmem [#allocation8], 16
    %v310 = vld [vmem:[%s309] sm:$0xff]
    %v311 = vld [vmem:[%s309 + $0x8] sm:$0xff]
    %s312 = scalar_lea.vmem [#allocation10], 32
    %v313 = vld [vmem:[%s312] sm:$0xff]
    %v314 = vld [vmem:[%s312 + $0x8] sm:$0xff]
    %v315 = vld [vmem:[%s312 + $0x10] sm:$0xff]
    %v316 = vld [vmem:[%s312 + $0x18] sm:$0xff]
    %v317 = vrot.slane %v94, 1
    %v318 = vsel %vm107, %v95, %v317
    %v319 = vsel %vm109, %v318, 0
    %321 = vmatprep.subr.mxu0 0.0
    %322 = vmatpush1.msra.mxu0 %v313
    %323 = vmatprep.subr.mxu0 0.0
    %324 = vmatpush1.msra.mxu0 %v314
    %325 = vmatprep.subr.mxu0 0.0
    %326 = vmatpush1.msra.mxu0 %v315
    %327 = vmatprep.subr.mxu0 0.0
    %328 = vmatpush1.msra.mxu0 %v316
    %329 = vmatprep.subr.mxu0 0.0
    %330 = vmatpush1.msra.mxu0 0.0
    %331 = vmatprep.subr.mxu0 0.0
    %332 = vmatpush1.msra.mxu0 0.0
    %333 = vmatprep.subr.mxu0 0.0
    %334 = vmatpush1.msra.mxu0 0.0
    %335 = vmatprep.subr.mxu0 0.0
    %336 = vmatpush1.msra.mxu0 0.0
    %337 = vmatprep.subr.mxu0 0.0
    %338 = vmatpush1.msra.mxu0 0.0
    %339 = vmatprep.subr.mxu0 0.0
    %340 = vmatpush1.msra.mxu0 0.0
    %341 = vmatprep.subr.mxu0 0.0
    %342 = vmatpush1.msra.mxu0 0.0
    %343 = vmatprep.subr.mxu0 0.0
    %344 = vmatpush1.msra.mxu0 0.0
    %345 = vmatprep.subr.mxu0 0.0
    %346 = vmatpush1.msra.mxu0 0.0
    %347 = vmatprep.subr.mxu0 0.0
    %348 = vmatpush1.msra.mxu0 0.0
    %349 = vmatprep.subr.mxu0 0.0
    %350 = vmatpush1.msra.mxu0 0.0
    %351 = vmatprep.subr.mxu0 0.0
    %352 = vmatpush1.msra.mxu0 0.0
    %353 = vmatprep.subr.mxu0 0.0
    %354 = vmatpush1.msra.mxu0 0.0
    %355 = vmatprep.subr.mxu0 0.0
    %356 = vmatpush1.msra.mxu0 0.0
    %357 = vmatprep.subr.mxu0 0.0
    %358 = vmatpush1.msra.mxu0 0.0
    %359 = vmatprep.subr.mxu0 0.0
    %360 = vmatpush1.msra.mxu0 0.0
    %361 = vmatprep.subr.mxu0 0.0
    %362 = vmatpush1.msra.mxu0 0.0
    %363 = vmatprep.subr.mxu0 0.0
    %364 = vmatpush1.msra.mxu0 0.0
    %365 = vmatprep.subr.mxu0 0.0
    %366 = vmatpush1.msra.mxu0 0.0
    %367 = vmatprep.subr.mxu0 0.0
    %368 = vmatpush1.msra.mxu0 0.0
    %369 = vmatprep.subr.mxu0 0.0
    %370 = vmatpush1.msra.mxu0 0.0
    %371 = vmatprep.subr.mxu0 0.0
    %372 = vmatpush1.msra.mxu0 0.0
    %373 = vmatprep.subr.mxu0 0.0
    %374 = vmatpush1.msra.mxu0 0.0
    %375 = vmatprep.subr.mxu0 0.0
    %376 = vmatpush1.msra.mxu0 0.0
    %377 = vmatprep.subr.mxu0 0.0
    %378 = vmatpush1.msra.mxu0 0.0
    %379 = vmatprep.subr.mxu0 0.0
    %380 = vmatpush1.msra.mxu0 0.0
    %381 = vmatprep.subr.mxu0 0.0
    %382 = vmatpush1.msra.mxu0 0.0
    %383 = vmatprep.subr.mxu0 0.0
    %384 = vmatpush1.msra.mxu0 0.0
    %385 = vmatprep.mubr.f32.mxu0 0.0
    %386 = vmatmul.mubr.f32.gmra.mrb[0].mxu0 %v319
    %v387 = vpop.f32.mrb[0].mxu0
    %v388 = vadd.f32 0.0, %v387
    %v389 = vpop.f32.mrb[0].mxu0
    %390 = vdwg.mxu0
    %v391 = vrot.slane %v92, 1
    %v392 = vsel %vm107, %v93, %v391
    %v393 = vsel %vm186, %v392, 0
    %395 = vmatprep.subr.mxu0 0.0
    %396 = vmatpush1.msra.mxu0 %v310
    %397 = vmatprep.subr.mxu0 0.0
    %398 = vmatpush1.msra.mxu0 %v311
    %399 = vmatprep.subr.mxu0 0.0
    %400 = vmatpush1.msra.mxu0 0.0
    %401 = vmatprep.subr.mxu0 0.0
    %402 = vmatpush1.msra.mxu0 0.0
    %403 = vmatprep.subr.mxu0 0.0
    %404 = vmatpush1.msra.mxu0 0.0
    %405 = vmatprep.subr.mxu0 0.0
    %406 = vmatpush1.msra.mxu0 0.0
    %407 = vmatprep.subr.mxu0 0.0
    %408 = vmatpush1.msra.mxu0 0.0
    %409 = vmatprep.subr.mxu0 0.0
    %410 = vmatpush1.msra.mxu0 0.0
    %411 = vmatprep.subr.mxu0 0.0
    %412 = vmatpush1.msra.mxu0 0.0
    %413 = vmatprep.subr.mxu0 0.0
    %414 = vmatpush1.msra.mxu0 0.0
    %415 = vmatprep.subr.mxu0 0.0
    %416 = vmatpush1.msra.mxu0 0.0
    %417 = vmatprep.subr.mxu0 0.0
    %418 = vmatpush1.msra.mxu0 0.0
    %419 = vmatprep.subr.mxu0 0.0
    %420 = vmatpush1.msra.mxu0 0.0
    %421 = vmatprep.subr.mxu0 0.0
    %422 = vmatpush1.msra.mxu0 0.0
    %423 = vmatprep.subr.mxu0 0.0
    %424 = vmatpush1.msra.mxu0 0.0
    %425 = vmatprep.subr.mxu0 0.0
    %426 = vmatpush1.msra.mxu0 0.0
    %427 = vmatprep.subr.mxu0 0.0
    %428 = vmatpush1.msra.mxu0 0.0
    %429 = vmatprep.subr.mxu0 0.0
    %430 = vmatpush1.msra.mxu0 0.0
    %431 = vmatprep.subr.mxu0 0.0
    %432 = vmatpush1.msra.mxu0 0.0
    %433 = vmatprep.subr.mxu0 0.0
    %434 = vmatpush1.msra.mxu0 0.0
    %435 = vmatprep.subr.mxu0 0.0
    %436 = vmatpush1.msra.mxu0 0.0
    %437 = vmatprep.subr.mxu0 0.0
    %438 = vmatpush1.msra.mxu0 0.0
    %439 = vmatprep.subr.mxu0 0.0
    %440 = vmatpush1.msra.mxu0 0.0
    %441 = vmatprep.subr.mxu0 0.0
    %442 = vmatpush1.msra.mxu0 0.0
    %443 = vmatprep.subr.mxu0 0.0
    %444 = vmatpush1.msra.mxu0 0.0
    %445 = vmatprep.subr.mxu0 0.0
    %446 = vmatpush1.msra.mxu0 0.0
    %447 = vmatprep.subr.mxu0 0.0
    %448 = vmatpush1.msra.mxu0 0.0
    %449 = vmatprep.subr.mxu0 0.0
    %450 = vmatpush1.msra.mxu0 0.0
    %451 = vmatprep.subr.mxu0 0.0
    %452 = vmatpush1.msra.mxu0 0.0
    %453 = vmatprep.subr.mxu0 0.0
    %454 = vmatpush1.msra.mxu0 0.0
    %455 = vmatprep.subr.mxu0 0.0
    %456 = vmatpush1.msra.mxu0 0.0
    %457 = vmatprep.subr.mxu0 0.0
    %458 = vmatpush1.msra.mxu0 0.0
    %459 = vmatprep.mubr.f32.mxu0 0.0
    %460 = vmatmul.mubr.f32.gmra.mrb[0].mxu0 %v393
    %v461 = vpop.f32.mrb[0].mxu0
    %v462 = vadd.f32 %v388, %v461
    %v463 = vpop.f32.mrb[0].mxu0
    %464 = vdwg.mxu0
    %v465 = vxor.u32 %v462, 2147483648
    %v466 = vmul.f32 %v465, 1.442695
    %v467 = vpow.pop %v466
    %v468 = vadd.f32 %v467, 1.0
    %v469 = vrcp.pop %v468
    %v470 = vmul.f32 1.0, %v469
    %v471 = vtanh.pop %v462
    %v473 = vrot.slane %v470, 7
    %474 = vrot.lane.b32.xlu0 %v473, 96
    %v475 = vpop.permute.xlu0 %474
    %476 = vrot.lane.b32.xlu0 %v470, 96
    %v477 = vpop.permute.xlu0 %476
    %v480 = vmul.f32 %v96, %v475
    %v481 = vmul.f32 %v97, %v477
    %483 = vrot.lane.b32.xlu0 %v471, 32
    %v484 = vpop.permute.xlu0 %483
    %v486 = vmul.f32 %v470, %v484
    %v488 = vrot.slane %v486, 7
    %v491 = vadd.f32 %v480, %v488
    %v492 = vadd.f32 %v481, %v486
    %v493 = vtanh.pop %v491
    %v494 = vtanh.pop %v492
    %v497 = vrot.slane %v493, 1
    %v498 = vsel %vm107, %v494, %v497
    %499 = vrot.lane.b32.xlu0 %v498, 64
    %v500 = vpop.permute.xlu0 %499
    %v502 = vmul.f32 %v470, %v500
    %504 = vrot.lane.b32.xlu0 %v502, 96
    %v505 = vpop.permute.xlu0 %504
    %vm507 = vcmask 517376
    %508 = vst.msk [vmem:[#allocation11] sm:$0x3] %vm507, %v505
    %v511 = vrot.slane %v492, 7
    %vm512 = vcmask 1042434
    %v513 = vsel %vm512, %v511, %v491
    %514 = vrot.lane.b32.xlu0 %v513, 32
    %v515 = vpop.permute.xlu0 %514
    %vm517 = vcmask 518401
    %518 = vst.msk [vmem:[#allocation12 - $0x1] sm:$0x6] %vm517, %v515
    %s519 = scalar_lea.vmem [#allocation8], 32
    %v520 = vld [vmem:[%s519] sm:$0xff]
    %v521 = vld [vmem:[%s519 + $0x8] sm:$0xff]
    %s522 = scalar_lea.vmem [#allocation10], 64
    %v523 = vld [vmem:[%s522] sm:$0xff]
    %v524 = vld [vmem:[%s522 + $0x8] sm:$0xff]
    %v525 = vld [vmem:[%s522 + $0x10] sm:$0xff]
    %v526 = vld [vmem:[%s522 + $0x18] sm:$0xff]
    %v527 = vrot.slane %v94, 2
    %v528 = vrot.slane %v95, 1
    %v529 = vsel %vm107, %v528, %v527
    %v530 = vsel %vm109, %v529, 0
    %532 = vmatprep.subr.mxu0 0.0
    %533 = vmatpush1.msra.mxu0 %v523
    %534 = vmatprep.subr.mxu0 0.0
    %535 = vmatpush1.msra.mxu0 %v524
    %536 = vmatprep.subr.mxu0 0.0
    %537 = vmatpush1.msra.mxu0 %v525
    %538 = vmatprep.subr.mxu0 0.0
    %539 = vmatpush1.msra.mxu0 %v526
    %540 = vmatprep.subr.mxu0 0.0
    %541 = vmatpush1.msra.mxu0 0.0
    %542 = vmatprep.subr.mxu0 0.0
    %543 = vmatpush1.msra.mxu0 0.0
    %544 = vmatprep.subr.mxu0 0.0
    %545 = vmatpush1.msra.mxu0 0.0
    %546 = vmatprep.subr.mxu0 0.0
    %547 = vmatpush1.msra.mxu0 0.0
    %548 = vmatprep.subr.mxu0 0.0
    %549 = vmatpush1.msra.mxu0 0.0
    %550 = vmatprep.subr.mxu0 0.0
    %551 = vmatpush1.msra.mxu0 0.0
    %552 = vmatprep.subr.mxu0 0.0
    %553 = vmatpush1.msra.mxu0 0.0
    %554 = vmatprep.subr.mxu0 0.0
    %555 = vmatpush1.msra.mxu0 0.0
    %556 = vmatprep.subr.mxu0 0.0
    %557 = vmatpush1.msra.mxu0 0.0
    %558 = vmatprep.subr.mxu0 0.0
    %559 = vmatpush1.msra.mxu0 0.0
    %560 = vmatprep.subr.mxu0 0.0
    %561 = vmatpush1.msra.mxu0 0.0
    %562 = vmatprep.subr.mxu0 0.0
    %563 = vmatpush1.msra.mxu0 0.0
    %564 = vmatprep.subr.mxu0 0.0
    %565 = vmatpush1.msra.mxu0 0.0
    %566 = vmatprep.subr.mxu0 0.0
    %567 = vmatpush1.msra.mxu0 0.0
    %568 = vmatprep.subr.mxu0 0.0
    %569 = vmatpush1.msra.mxu0 0.0
    %570 = vmatprep.subr.mxu0 0.0
    %571 = vmatpush1.msra.mxu0 0.0
    %572 = vmatprep.subr.mxu0 0.0
    %573 = vmatpush1.msra.mxu0 0.0
    %574 = vmatprep.subr.mxu0 0.0
    %575 = vmatpush1.msra.mxu0 0.0
    %576 = vmatprep.subr.mxu0 0.0
    %577 = vmatpush1.msra.mxu0 0.0
    %578 = vmatprep.subr.mxu0 0.0
    %579 = vmatpush1.msra.mxu0 0.0
    %580 = vmatprep.subr.mxu0 0.0
    %581 = vmatpush1.msra.mxu0 0.0
    %582 = vmatprep.subr.mxu0 0.0
    %583 = vmatpush1.msra.mxu0 0.0
    %584 = vmatprep.subr.mxu0 0.0
    %585 = vmatpush1.msra.mxu0 0.0
    %586 = vmatprep.subr.mxu0 0.0
    %587 = vmatpush1.msra.mxu0 0.0
    %588 = vmatprep.subr.mxu0 0.0
    %589 = vmatpush1.msra.mxu0 0.0
    %590 = vmatprep.subr.mxu0 0.0
    %591 = vmatpush1.msra.mxu0 0.0
    %592 = vmatprep.subr.mxu0 0.0
    %593 = vmatpush1.msra.mxu0 0.0
    %594 = vmatprep.subr.mxu0 0.0
    %595 = vmatpush1.msra.mxu0 0.0
    %596 = vmatprep.mubr.f32.mxu0 0.0
    %597 = vmatmul.mubr.f32.gmra.mrb[0].mxu0 %v530
    %v598 = vpop.f32.mrb[0].mxu0
    %v599 = vadd.f32 0.0, %v598
    %v600 = vpop.f32.mrb[0].mxu0
    %601 = vdwg.mxu0
    %v602 = vrot.slane %v92, 2
    %v603 = vrot.slane %v93, 1
    %v604 = vsel %vm107, %v603, %v602
    %v605 = vsel %vm186, %v604, 0
    %607 = vmatprep.subr.mxu0 0.0
    %608 = vmatpush1.msra.mxu0 %v520
    %609 = vmatprep.subr.mxu0 0.0
    %610 = vmatpush1.msra.mxu0 %v521
    %611 = vmatprep.subr.mxu0 0.0
    %612 = vmatpush1.msra.mxu0 0.0
    %613 = vmatprep.subr.mxu0 0.0
    %614 = vmatpush1.msra.mxu0 0.0
    %615 = vmatprep.subr.mxu0 0.0
    %616 = vmatpush1.msra.mxu0 0.0
    %617 = vmatprep.subr.mxu0 0.0
    %618 = vmatpush1.msra.mxu0 0.0
    %619 = vmatprep.subr.mxu0 0.0
    %620 = vmatpush1.msra.mxu0 0.0
    %621 = vmatprep.subr.mxu0 0.0
    %622 = vmatpush1.msra.mxu0 0.0
    %623 = vmatprep.subr.mxu0 0.0
    %624 = vmatpush1.msra.mxu0 0.0
    %625 = vmatprep.subr.mxu0 0.0
    %626 = vmatpush1.msra.mxu0 0.0
    %627 = vmatprep.subr.mxu0 0.0
    %628 = vmatpush1.msra.mxu0 0.0
    %629 = vmatprep.subr.mxu0 0.0
    %630 = vmatpush1.msra.mxu0 0.0
    %631 = vmatprep.subr.mxu0 0.0
    %632 = vmatpush1.msra.mxu0 0.0
    %633 = vmatprep.subr.mxu0 0.0
    %634 = vmatpush1.msra.mxu0 0.0
    %635 = vmatprep.subr.mxu0 0.0
    %636 = vmatpush1.msra.mxu0 0.0
    %637 = vmatprep.subr.mxu0 0.0
    %638 = vmatpush1.msra.mxu0 0.0
    %639 = vmatprep.subr.mxu0 0.0
    %640 = vmatpush1.msra.mxu0 0.0
    %641 = vmatprep.subr.mxu0 0.0
    %642 = vmatpush1.msra.mxu0 0.0
    %643 = vmatprep.subr.mxu0 0.0
    %644 = vmatpush1.msra.mxu0 0.0
    %645 = vmatprep.subr.mxu0 0.0
    %646 = vmatpush1.msra.mxu0 0.0
    %647 = vmatprep.subr.mxu0 0.0
    %648 = vmatpush1.msra.mxu0 0.0
    %649 = vmatprep.subr.mxu0 0.0
    %650 = vmatpush1.msra.mxu0 0.0
    %651 = vmatprep.subr.mxu0 0.0
    %652 = vmatpush1.msra.mxu0 0.0
    %653 = vmatprep.subr.mxu0 0.0
    %654 = vmatpush1.msra.mxu0 0.0
    %655 = vmatprep.subr.mxu0 0.0
    %656 = vmatpush1.msra.mxu0 0.0
    %657 = vmatprep.subr.mxu0 0.0
    %658 = vmatpush1.msra.mxu0 0.0
    %659 = vmatprep.subr.mxu0 0.0
    %660 = vmatpush1.msra.mxu0 0.0
    %661 = vmatprep.subr.mxu0 0.0
    %662 = vmatpush1.msra.mxu0 0.0
    %663 = vmatprep.subr.mxu0 0.0
    %664 = vmatpush1.msra.mxu0 0.0
    %665 = vmatprep.subr.mxu0 0.0
    %666 = vmatpush1.msra.mxu0 0.0
    %667 = vmatprep.subr.mxu0 0.0
    %668 = vmatpush1.msra.mxu0 0.0
    %669 = vmatprep.subr.mxu0 0.0
    %670 = vmatpush1.msra.mxu0 0.0
    %671 = vmatprep.mubr.f32.mxu0 0.0
    %672 = vmatmul.mubr.f32.gmra.mrb[0].mxu0 %v605
    %v673 = vpop.f32.mrb[0].mxu0
    %v674 = vadd.f32 %v599, %v673
    %v675 = vpop.f32.mrb[0].mxu0
    %676 = vdwg.mxu0
    %v677 = vxor.u32 %v674, 2147483648
    %v678 = vmul.f32 %v677, 1.442695
    %v679 = vpow.pop %v678
    %v680 = vadd.f32 %v679, 1.0
    %v681 = vrcp.pop %v680
    %v682 = vmul.f32 1.0, %v681
    %v683 = vtanh.pop %v674
    %v685 = vrot.slane %v682, 6
    %v686 = vrot.slane %v682, 7
    %687 = vrot.lane.b32.xlu0 %v685, 96
    %v688 = vpop.permute.xlu0 %687
    %689 = vrot.lane.b32.xlu0 %v686, 96
    %v690 = vpop.permute.xlu0 %689
    %v693 = vmul.f32 %v96, %v688
    %v694 = vmul.f32 %v97, %v690
    %696 = vrot.lane.b32.xlu0 %v683, 32
    %v697 = vpop.permute.xlu0 %696
    %v699 = vmul.f32 %v682, %v697
    %v701 = vrot.slane %v699, 6
    %v702 = vrot.slane %v699, 7
    %v705 = vadd.f32 %v693, %v701
    %v706 = vadd.f32 %v694, %v702
    %v707 = vtanh.pop %v705
    %v708 = vtanh.pop %v706
    %v711 = vrot.slane %v707, 2
    %v712 = vrot.slane %v708, 1
    %v713 = vsel %vm107, %v712, %v711
    %714 = vrot.lane.b32.xlu0 %v713, 64
    %v715 = vpop.permute.xlu0 %714
    %v717 = vmul.f32 %v682, %v715
    %vm718 = vcmask 779776
    %719 = vst.msk [vmem:[#allocation11] sm:$0x3] %vm718, %v717
    %v722 = vrot.slane %v706, 7
    %vm723 = vcmask 1043459
    %v724 = vsel %vm723, %v722, %v705
    %725 = vrot.lane.b32.xlu0 %v724, 64
    %v726 = vpop.permute.xlu0 %725
    %vm728 = vcmask 781826
    %729 = vst.msk [vmem:[#allocation12 - $0x2] sm:$0xc] %vm728, %v726
    %s730 = scalar_lea.vmem [#allocation8], 48
    %v731 = vld [vmem:[%s730] sm:$0xff]
    %v732 = vld [vmem:[%s730 + $0x8] sm:$0xff]
    %s733 = scalar_lea.vmem [#allocation10], 96
    %v734 = vld [vmem:[%s733] sm:$0xff]
    %v735 = vld [vmem:[%s733 + $0x8] sm:$0xff]
    %v736 = vld [vmem:[%s733 + $0x10] sm:$0xff]
    %v737 = vld [vmem:[%s733 + $0x18] sm:$0xff]
    %v738 = vrot.slane %v94, 3
    %v739 = vrot.slane %v95, 2
    %v740 = vsel %vm107, %v739, %v738
    %v741 = vsel %vm109, %v740, 0
    %743 = vmatprep.subr.mxu0 0.0
    %744 = vmatpush1.msra.mxu0 %v734
    %745 = vmatprep.subr.mxu0 0.0
    %746 = vmatpush1.msra.mxu0 %v735
    %747 = vmatprep.subr.mxu0 0.0
    %748 = vmatpush1.msra.mxu0 %v736
    %749 = vmatprep.subr.mxu0 0.0
    %750 = vmatpush1.msra.mxu0 %v737
    %751 = vmatprep.subr.mxu0 0.0
    %752 = vmatpush1.msra.mxu0 0.0
    %753 = vmatprep.subr.mxu0 0.0
    %754 = vmatpush1.msra.mxu0 0.0
    %755 = vmatprep.subr.mxu0 0.0
    %756 = vmatpush1.msra.mxu0 0.0
    %757 = vmatprep.subr.mxu0 0.0
    %758 = vmatpush1.msra.mxu0 0.0
    %759 = vmatprep.subr.mxu0 0.0
    %760 = vmatpush1.msra.mxu0 0.0
    %761 = vmatprep.subr.mxu0 0.0
    %762 = vmatpush1.msra.mxu0 0.0
    %763 = vmatprep.subr.mxu0 0.0
    %764 = vmatpush1.msra.mxu0 0.0
    %765 = vmatprep.subr.mxu0 0.0
    %766 = vmatpush1.msra.mxu0 0.0
    %767 = vmatprep.subr.mxu0 0.0
    %768 = vmatpush1.msra.mxu0 0.0
    %769 = vmatprep.subr.mxu0 0.0
    %770 = vmatpush1.msra.mxu0 0.0
    %771 = vmatprep.subr.mxu0 0.0
    %772 = vmatpush1.msra.mxu0 0.0
    %773 = vmatprep.subr.mxu0 0.0
    %774 = vmatpush1.msra.mxu0 0.0
    %775 = vmatprep.subr.mxu0 0.0
    %776 = vmatpush1.msra.mxu0 0.0
    %777 = vmatprep.subr.mxu0 0.0
    %778 = vmatpush1.msra.mxu0 0.0
    %779 = vmatprep.subr.mxu0 0.0
    %780 = vmatpush1.msra.mxu0 0.0
    %781 = vmatprep.subr.mxu0 0.0
    %782 = vmatpush1.msra.mxu0 0.0
    %783 = vmatprep.subr.mxu0 0.0
    %784 = vmatpush1.msra.mxu0 0.0
    %785 = vmatprep.subr.mxu0 0.0
    %786 = vmatpush1.msra.mxu0 0.0
    %787 = vmatprep.subr.mxu0 0.0
    %788 = vmatpush1.msra.mxu0 0.0
    %789 = vmatprep.subr.mxu0 0.0
    %790 = vmatpush1.msra.mxu0 0.0
    %791 = vmatprep.subr.mxu0 0.0
    %792 = vmatpush1.msra.mxu0 0.0
    %793 = vmatprep.subr.mxu0 0.0
    %794 = vmatpush1.msra.mxu0 0.0
    %795 = vmatprep.subr.mxu0 0.0
    %796 = vmatpush1.msra.mxu0 0.0
    %797 = vmatprep.subr.mxu0 0.0
    %798 = vmatpush1.msra.mxu0 0.0
    %799 = vmatprep.subr.mxu0 0.0
    %800 = vmatpush1.msra.mxu0 0.0
    %801 = vmatprep.subr.mxu0 0.0
    %802 = vmatpush1.msra.mxu0 0.0
    %803 = vmatprep.subr.mxu0 0.0
    %804 = vmatpush1.msra.mxu0 0.0
    %805 = vmatprep.subr.mxu0 0.0
    %806 = vmatpush1.msra.mxu0 0.0
    %807 = vmatprep.mubr.f32.mxu0 0.0
    %808 = vmatmul.mubr.f32.gmra.mrb[0].mxu0 %v741
    %v809 = vpop.f32.mrb[0].mxu0
    %v810 = vadd.f32 0.0, %v809
    %v811 = vpop.f32.mrb[0].mxu0
    %812 = vdwg.mxu0
    %v813 = vrot.slane %v92, 3
    %v814 = vrot.slane %v93, 2
    %v815 = vsel %vm107, %v814, %v813
    %v816 = vsel %vm186, %v815, 0
    %818 = vmatprep.subr.mxu0 0.0
    %819 = vmatpush1.msra.mxu0 %v731
    %820 = vmatprep.subr.mxu0 0.0
    %821 = vmatpush1.msra.mxu0 %v732
    %822 = vmatprep.subr.mxu0 0.0
    %823 = vmatpush1.msra.mxu0 0.0
    %824 = vmatprep.subr.mxu0 0.0
    %825 = vmatpush1.msra.mxu0 0.0
    %826 = vmatprep.subr.mxu0 0.0
    %827 = vmatpush1.msra.mxu0 0.0
    %828 = vmatprep.subr.mxu0 0.0
    %829 = vmatpush1.msra.mxu0 0.0
    %830 = vmatprep.subr.mxu0 0.0
    %831 = vmatpush1.msra.mxu0 0.0
    %832 = vmatprep.subr.mxu0 0.0
    %833 = vmatpush1.msra.mxu0 0.0
    %834 = vmatprep.subr.mxu0 0.0
    %835 = vmatpush1.msra.mxu0 0.0
    %836 = vmatprep.subr.mxu0 0.0
    %837 = vmatpush1.msra.mxu0 0.0
    %838 = vmatprep.subr.mxu0 0.0
    %839 = vmatpush1.msra.mxu0 0.0
    %840 = vmatprep.subr.mxu0 0.0
    %841 = vmatpush1.msra.mxu0 0.0
    %842 = vmatprep.subr.mxu0 0.0
    %843 = vmatpush1.msra.mxu0 0.0
    %844 = vmatprep.subr.mxu0 0.0
    %845 = vmatpush1.msra.mxu0 0.0
    %846 = vmatprep.subr.mxu0 0.0
    %847 = vmatpush1.msra.mxu0 0.0
    %848 = vmatprep.subr.mxu0 0.0
    %849 = vmatpush1.msra.mxu0 0.0
    %850 = vmatprep.subr.mxu0 0.0
    %851 = vmatpush1.msra.mxu0 0.0
    %852 = vmatprep.subr.mxu0 0.0
    %853 = vmatpush1.msra.mxu0 0.0
    %854 = vmatprep.subr.mxu0 0.0
    %855 = vmatpush1.msra.mxu0 0.0
    %856 = vmatprep.subr.mxu0 0.0
    %857 = vmatpush1.msra.mxu0 0.0
    %858 = vmatprep.subr.mxu0 0.0
    %859 = vmatpush1.msra.mxu0 0.0
    %860 = vmatprep.subr.mxu0 0.0
    %861 = vmatpush1.msra.mxu0 0.0
    %862 = vmatprep.subr.mxu0 0.0
    %863 = vmatpush1.msra.mxu0 0.0
    %864 = vmatprep.subr.mxu0 0.0
    %865 = vmatpush1.msra.mxu0 0.0
    %866 = vmatprep.subr.mxu0 0.0
    %867 = vmatpush1.msra.mxu0 0.0
    %868 = vmatprep.subr.mxu0 0.0
    %869 = vmatpush1.msra.mxu0 0.0
    %870 = vmatprep.subr.mxu0 0.0
    %871 = vmatpush1.msra.mxu0 0.0
    %872 = vmatprep.subr.mxu0 0.0
    %873 = vmatpush1.msra.mxu0 0.0
    %874 = vmatprep.subr.mxu0 0.0
    %875 = vmatpush1.msra.mxu0 0.0
    %876 = vmatprep.subr.mxu0 0.0
    %877 = vmatpush1.msra.mxu0 0.0
    %878 = vmatprep.subr.mxu0 0.0
    %879 = vmatpush1.msra.mxu0 0.0
    %880 = vmatprep.subr.mxu0 0.0
    %881 = vmatpush1.msra.mxu0 0.0
    %882 = vmatprep.mubr.f32.mxu0 0.0
    %883 = vmatmul.mubr.f32.gmra.mrb[0].mxu0 %v816
    %v884 = vpop.f32.mrb[0].mxu0
    %v885 = vadd.f32 %v810, %v884
    %v886 = vpop.f32.mrb[0].mxu0
    %887 = vdwg.mxu0
    %v888 = vxor.u32 %v885, 2147483648
    %v889 = vmul.f32 %v888, 1.442695
    %v890 = vpow.pop %v889
    %v891 = vadd.f32 %v890, 1.0
    %v892 = vrcp.pop %v891
    %v893 = vmul.f32 1.0, %v892
    %v894 = vtanh.pop %v885
    %v896 = vrot.slane %v893, 5
    %v897 = vrot.slane %v893, 6
    %898 = vrot.lane.b32.xlu0 %v896, 96
    %v899 = vpop.permute.xlu0 %898
    %900 = vrot.lane.b32.xlu0 %v897, 96
    %v901 = vpop.permute.xlu0 %900
    %v904 = vmul.f32 %v96, %v899
    %v905 = vmul.f32 %v97, %v901
    %907 = vrot.lane.b32.xlu0 %v894, 32
    %v908 = vpop.permute.xlu0 %907
    %v910 = vmul.f32 %v893, %v908
    %v912 = vrot.slane %v910, 5
    %v913 = vrot.slane %v910, 6
    %v916 = vadd.f32 %v904, %v912
    %v917 = vadd.f32 %v905, %v913
    %v918 = vtanh.pop %v916
    %v919 = vtanh.pop %v917
    %v922 = vrot.slane %v918, 3
    %v923 = vrot.slane %v919, 2
    %v924 = vsel %vm107, %v923, %v922
    %925 = vrot.lane.b32.xlu0 %v924, 64
    %v926 = vpop.permute.xlu0 %925
    %v928 = vmul.f32 %v893, %v926
    %930 = vrot.lane.b32.xlu0 %v928, 32
    %v931 = vpop.permute.xlu0 %930
    %vm933 = vcmask 1042176
    %934 = vst.msk [vmem:[#allocation11] sm:$0x3] %vm933, %v931
    %v937 = vrot.slane %v917, 7
    %vm938 = vcmask 1044484
    %v939 = vsel %vm938, %v937, %v916
    %940 = vrot.lane.b32.xlu0 %v939, 96
    %v941 = vpop.permute.xlu0 %940
    %vm943 = vcmask 1045251
    %944 = vst.msk [vmem:[#allocation12 - $0x3] sm:$0x18] %vm943, %v941
    // Predicated region
    $region42: #{tpu_custom_call.1} parent=1 // pred_check
      _
    $region43: #{tpu_custom_call.1} parent=1 // pred_check_branch
      %946 = sbr.rel (0) target = $region45
    $region44: #{tpu_custom_call.1} parent=1 // pred_region
      %s948 = ssub.s32 32, 32
      %949 = vsyncadd [#allocation4], %s948
      %s951 = sshll.u32 [#allocation11], 4
      %s952 = int_to_ptr.vmem [resolvable:$true] %s951
      %954 = dma.vmem_to_hbm [thread:$0]  %s952, 32, %s5, [#allocation4]
    $region45: #{tpu_custom_call.1} parent=1 // pred_fallthru
      _
    // Predicated region
    $region46: #{tpu_custom_call.1} parent=1 // pred_check
      _
    $region47: #{tpu_custom_call.1} parent=1 // pred_check_branch
      %956 = sbr.rel (0) target = $region49
    $region48: #{tpu_custom_call.1} parent=1 // pred_region
      %s958 = ssub.s32 32, 32
      %959 = vsyncadd [#allocation13], %s958
      %s961 = sshll.u32 [#allocation12], 4
      %s962 = int_to_ptr.vmem [resolvable:$true] %s961
      %964 = dma.vmem_to_hbm [thread:$0]  %s962, 32, %s6, [#allocation13]
    $region49: #{tpu_custom_call.1} parent=1 // pred_fallthru
      _
    // Predicated region
    $region50: #{tpu_custom_call.1} parent=1 // pred_check
      _
    $region51: #{tpu_custom_call.1} parent=1 // pred_check_branch
      %966 = sbr.rel (0) target = $region53
    $region52: #{tpu_custom_call.1} parent=1 // pred_region
      %967 = dma.done [#allocation4], 32
    $region53: #{tpu_custom_call.1} parent=1 // pred_fallthru
      _
    // Predicated region
    $region54: #{tpu_custom_call.1} parent=1 // pred_check
      _
    $region55: #{tpu_custom_call.1} parent=1 // pred_check_branch
      %969 = sbr.rel (0) target = $region57
    $region56: #{tpu_custom_call.1} parent=1 // pred_region
      %970 = dma.done [#allocation13], 32
    $region57: #{tpu_custom_call.1} parent=1 // pred_fallthru
      _
    %971 = vsyncpa [#allocation3], 1
    %972 = vsyncpa [#allocation6], 1
    %973 = vsyncpa [#allocation9], 1
    %974 = vsyncpa [#allocation4], 1
    %975 = vsyncpa [#allocation13], 1

</llo_original>
